<compile_context>
chip_gen: v7x
topology: tpu7x:2x2x1
jax: 0.10.0
libtpu: 0.0.40
codegen_flags: <defaults>
</compile_context>

<pallas_src>
import functools

import jax
import jax.numpy as jnp
import numpy as np
from jax.experimental import pallas as pl
from jax.experimental.pallas import tpu as pltpu

# ---------------- model hyper-params (small, deterministic) ----------------
INPUT_SIZE = 64      # input feature dim
HIDDEN = 128         # hidden_size (lane-aligned)
NUM_RES_DNN = 2
NUM_DNN = 2
BATCH = 16
OUT_PAD = 128        # classifier output padded to a full lane width
LN_EPS = 1e-5


def _layernorm_onepass(h, gamma, beta, eps=LN_EPS):
    # One-pass statistics: sum(h) and sum(h*h) have no data dependency, so the
    # two cross-lane (XLU) reductions issue back-to-back instead of serially.
    # Inputs are tanh-bounded, so E[x^2]-E[x]^2 in f32 holds the 1e-4 check.
    inv_n = 1.0 / h.shape[-1]
    s1 = jnp.sum(h, axis=-1, keepdims=True)
    s2 = jnp.sum(h * h, axis=-1, keepdims=True)
    mu = s1 * inv_n
    var = jnp.maximum(s2 * inv_n - mu * mu, 0.0)
    return (h - mu) * jax.lax.rsqrt(var + eps) * gamma + beta


def _res_dnn_kernel(x_ref, wp_ref, wdnn_ref, vec_ref, out_ref,
                    *, num_res_dnn, num_dnn):
    L = num_res_dnn * num_dnn
    R = num_res_dnn
    # Row offsets into the packed (NV, H) parameter-vector stack.
    BP = 0                       # bp
    BD = 1                       # bdnn[l]
    GD = 1 + L                   # gamma_dnn[l]
    BE = 1 + 2 * L               # beta_dnn[l]
    GR = 1 + 3 * L               # gamma_res[r]
    BR = 1 + 3 * L + R           # beta_res[r]
    WC = 1 + 3 * L + 2 * R       # classifier weight row
    BC = WC + 1                  # classifier bias (broadcast across H)

    x = x_ref[...]                                            # (TB, D)

    # prepare: Linear(input_size -> hidden); K = D (full last dim, no pad)
    h = jnp.dot(x, wp_ref[...], preferred_element_type=jnp.float32)
    h = h + vec_ref[BP:BP + 1, :]

    for r in range(num_res_dnn):
        shortcut = h
        for d in range(num_dnn):
            l = r * num_dnn + d
            w = wdnn_ref[l]                                   # (H, H)
            h = jnp.dot(h, w, preferred_element_type=jnp.float32)
            h = h + vec_ref[BD + l:BD + l + 1, :]
            # dropout: identity in eval mode
            h = jnp.tanh(h)
            h = _layernorm_onepass(h, vec_ref[GD + l:GD + l + 1, :],
                                   vec_ref[BE + l:BE + l + 1, :])
        h = jnp.tanh(shortcut + h)
        h = _layernorm_onepass(h, vec_ref[GR + r:GR + r + 1, :],
                               vec_ref[BR + r:BR + r + 1, :])

    # classifier: lane reduce against the packed wc row + scalar bias.
    wc = vec_ref[WC:WC + 1, :]                                # (1, H)
    bc = vec_ref[BC:BC + 1, 0:1]                              # (1, 1)
    logit = jnp.sum(h * wc, axis=-1, keepdims=True) + bc      # (TB, 1)
    sig = jax.nn.sigmoid(logit)
    out_ref[...] = jnp.broadcast_to(sig, out_ref.shape)       # lane-dense store


def prepare_packed_params(params):
    """One-time parameter packing (hoisted out of the per-call path)."""
    (wp, bp, wdnn, bdnn, gdnn, betadnn, gres, betares, wc, bc) = params
    H = wp.shape[1]
    rows = [
        bp.reshape(1, H),
        bdnn, gdnn, betadnn,
        gres, betares,
        wc.reshape(1, H),
        jnp.broadcast_to(bc.reshape(1, 1), (1, H)),
    ]
    vecs = jnp.concatenate(rows, axis=0).astype(jnp.float32)   # (NV, H)
    return (wp.astype(jnp.float32), wdnn.astype(jnp.float32), vecs)


def _pick_tb(batch):
    # B<=16: one tile (serial chain dominates; splitting adds only overhead).
    # Larger B: biggest tile <=128 giving >=2 grid steps (keeps both v7x TCs
    # busy).  Non-divisible batches fall back to a single full-batch tile.
    if batch <= 16:
        return batch
    for tb in (128, 64, 32, 16, 8):
        if tb < batch and batch % tb == 0:
            return tb
    return batch


def pure_res_dnn_classification(x, packed):
    wp, wdnn, vecs = packed
    B, D = x.shape
    H = wp.shape[1]
    L = wdnn.shape[0]
    NV = vecs.shape[0]
    R = (NV - 3 - 3 * L) // 2
    nd = L // R

    TB = _pick_tb(B)
    grid = (B // TB,)

    kernel = functools.partial(_res_dnn_kernel, num_res_dnn=R, num_dnn=nd)

    out = pl.pallas_call(
        kernel,
        out_shape=jax.ShapeDtypeStruct((B, OUT_PAD), jnp.float32),
        grid=grid,
        in_specs=[
            pl.BlockSpec((TB, D), lambda i: (i, 0)),        # x (no padding)
            pl.BlockSpec((D, H), lambda i: (0, 0)),         # Wp
            pl.BlockSpec((L, H, H), lambda i: (0, 0, 0)),   # W_dnn stack
            pl.BlockSpec((NV, H), lambda i: (0, 0)),        # packed vectors
        ],
        out_specs=pl.BlockSpec((TB, OUT_PAD), lambda i: (i, 0)),
        compiler_params=pltpu.CompilerParams(
            dimension_semantics=("parallel",)),
    )(x.astype(jnp.float32), wp, wdnn, vecs)
    return out[:, 0]                                   # squeeze padded lanes


# ---------------------- pure-JAX reference (for checking) ----------------------
def _layernorm_ref(h, gamma, beta, eps=LN_EPS):
    mu = jnp.mean(h, axis=-1, keepdims=True)
    var = jnp.mean((h - mu) ** 2, axis=-1, keepdims=True)
    return (h - mu) * jax.lax.rsqrt(var + eps) * gamma + beta


def reference(x, params):
    (wp, bp, wdnn, bdnn, gdnn, betadnn, gres, betares, wc, bc) = params
    h = x @ wp + bp[0]
    L = wdnn.shape[0]
    R = gres.shape[0]
    nd = L // R
    for r in range(R):
        shortcut = h
        for d in range(nd):
            l = r * nd + d
            h = h @ wdnn[l] + bdnn[l]
            h = jnp.tanh(h)
            h = _layernorm_ref(h, gdnn[l], betadnn[l])
        h = jnp.tanh(shortcut + h)
        h = _layernorm_ref(h, gres[r], betares[r])
    logit = jnp.sum(h * wc[0], axis=-1) + bc[0, 0]
    return jax.nn.sigmoid(logit)


def make_params(key):
    L = NUM_RES_DNN * NUM_DNN
    ks = jax.random.split(key, 6)
    scale_p = 1.0 / np.sqrt(INPUT_SIZE)
    scale_h = 1.0 / np.sqrt(HIDDEN)
    wp = jax.random.uniform(ks[0], (INPUT_SIZE, HIDDEN), jnp.float32, -scale_p, scale_p)
    bp = jax.random.uniform(ks[1], (1, HIDDEN), jnp.float32, -scale_p, scale_p)
    wdnn = jax.random.uniform(ks[2], (L, HIDDEN, HIDDEN), jnp.float32, -scale_h, scale_h)
    bdnn = jax.random.uniform(ks[3], (L, HIDDEN), jnp.float32, -scale_h, scale_h)
    gdnn = jnp.ones((L, HIDDEN), jnp.float32)
    betadnn = jnp.zeros((L, HIDDEN), jnp.float32)
    gres = jnp.ones((NUM_RES_DNN, HIDDEN), jnp.float32)
    betares = jnp.zeros((NUM_RES_DNN, HIDDEN), jnp.float32)
    wc = jax.random.uniform(ks[4], (1, HIDDEN), jnp.float32, -scale_h, scale_h)
    bc = jax.random.uniform(ks[5], (1, 1), jnp.float32, -scale_h, scale_h)
    return (wp, bp, wdnn, bdnn, gdnn, betadnn, gres, betares, wc, bc)


if __name__ == "__main__":
    key = jax.random.PRNGKey(0)
    kx, kp = jax.random.split(key)
    x = jax.random.normal(kx, (BATCH, INPUT_SIZE), jnp.float32)
    params = make_params(kp)

    # One-time packing, hoisted out of the per-call path.
    packed = jax.block_until_ready(prepare_packed_params(params))

    fwd = jax.jit(pure_res_dnn_classification)
    y = jax.block_until_ready(fwd(x, packed))

    y_ref = reference(x, params)
    np.testing.assert_allclose(np.asarray(y), np.asarray(y_ref), atol=1e-4, rtol=1e-4)
    assert y.shape == (BATCH,)
    print("KERNEL_OK")
</pallas_src>

<mosaic_0001>
module attributes {stable_mosaic.version = 11 : i64} {
  func.func @_res_dnn_kernel(%arg0: i32, %arg1: memref<16x64xf32, #tpu.memory_space<vmem>>, %arg2: memref<64x128xf32, #tpu.memory_space<vmem>>, %arg3: memref<4x128x128xf32, #tpu.memory_space<vmem>>, %arg4: memref<19x128xf32, #tpu.memory_space<vmem>>, %arg5: memref<16x128xf32, #tpu.memory_space<vmem>>) attributes {dimension_semantics = [#tpu.dimension_semantics<parallel>], iteration_bounds = array<i64: 1>, scalar_prefetch = 0 : i64, scratch_operands = 0 : i64, tpu.core_type = #tpu.core_type<tc>, window_params = [{transform_indices = @transform_0, window_bounds = array<i64: 16, 64>}, {pipeline_mode = #tpu.pipeline_mode<synchronous>, transform_indices = @transform_1, window_bounds = array<i64: 64, 128>}, {pipeline_mode = #tpu.pipeline_mode<synchronous>, transform_indices = @transform_2, window_bounds = array<i64: 4, 128, 128>}, {pipeline_mode = #tpu.pipeline_mode<synchronous>, transform_indices = @transform_3, window_bounds = array<i64: 19, 128>}, {transform_indices = @transform_4, window_bounds = array<i64: 16, 128>}]} {
    %c0 = arith.constant 0 : index
    %c0_0 = arith.constant 0 : index
    %0 = vector.load %arg1[%c0, %c0_0] : memref<16x64xf32, #tpu.memory_space<vmem>>, vector<16x64xf32>
    %c0_1 = arith.constant 0 : index
    %c0_2 = arith.constant 0 : index
    %1 = vector.load %arg2[%c0_1, %c0_2] : memref<64x128xf32, #tpu.memory_space<vmem>>, vector<64x128xf32>
    %cst = arith.constant dense<0.000000e+00> : vector<16x128xf32>
    %2 = tpu.matmul %0, %1, %cst {dimension_numbers = #tpu.dot_dimension_numbers<[1], [0], [0], [1], [0, 0, 1, 1], [], []>} : vector<16x64xf32>, vector<64x128xf32>, vector<16x128xf32> -> vector<16x128xf32>
    %c0_3 = arith.constant 0 : index
    %c0_4 = arith.constant 0 : index
    %3 = vector.load %arg4[%c0_3, %c0_4] : memref<19x128xf32, #tpu.memory_space<vmem>>, vector<1x128xf32>
    %4 = vector.broadcast %3 : vector<1x128xf32> to vector<16x128xf32>
    %5 = arith.addf %2, %4 : vector<16x128xf32>
    %c0_5 = arith.constant 0 : index
    %c0_6 = arith.constant 0 : index
    %c0_7 = arith.constant 0 : index
    %6 = vector.load %arg3[%c0_5, %c0_6, %c0_7] : memref<4x128x128xf32, #tpu.memory_space<vmem>>, vector<1x128x128xf32>
    %7 = vector.shape_cast %6 : vector<1x128x128xf32> to vector<128x128xf32>
    %cst_8 = arith.constant dense<0.000000e+00> : vector<16x128xf32>
    %8 = tpu.matmul %5, %7, %cst_8 {dimension_numbers = #tpu.dot_dimension_numbers<[1], [0], [0], [1], [0, 0, 1, 1], [], []>} : vector<16x128xf32>, vector<128x128xf32>, vector<16x128xf32> -> vector<16x128xf32>
    %c1 = arith.constant 1 : index
    %c0_9 = arith.constant 0 : index
    %9 = vector.load %arg4[%c1, %c0_9] : memref<19x128xf32, #tpu.memory_space<vmem>>, vector<1x128xf32>
    %10 = vector.broadcast %9 : vector<1x128xf32> to vector<16x128xf32>
    %11 = arith.addf %8, %10 : vector<16x128xf32>
    %12 = math.tanh %11 : vector<16x128xf32>
    %c5 = arith.constant 5 : index
    %c0_10 = arith.constant 0 : index
    %13 = vector.load %arg4[%c5, %c0_10] : memref<19x128xf32, #tpu.memory_space<vmem>>, vector<1x128xf32>
    %c9 = arith.constant 9 : index
    %c0_11 = arith.constant 0 : index
    %14 = vector.load %arg4[%c9, %c0_11] : memref<19x128xf32, #tpu.memory_space<vmem>>, vector<1x128xf32>
    %cst_12 = arith.constant dense<0.000000e+00> : vector<16xf32>
    %15 = vector.multi_reduction <add>, %12, %cst_12 [1] : vector<16x128xf32> to vector<16xf32>
    %16 = vector.shape_cast %15 : vector<16xf32> to vector<16x1xf32>
    %17 = arith.mulf %12, %12 : vector<16x128xf32>
    %cst_13 = arith.constant dense<0.000000e+00> : vector<16xf32>
    %18 = vector.multi_reduction <add>, %17, %cst_13 [1] : vector<16x128xf32> to vector<16xf32>
    %19 = vector.shape_cast %18 : vector<16xf32> to vector<16x1xf32>
    %cst_14 = arith.constant 7.812500e-03 : f32
    %20 = vector.broadcast %cst_14 : f32 to vector<16x1xf32>
    %21 = arith.mulf %16, %20 : vector<16x1xf32>
    %cst_15 = arith.constant 7.812500e-03 : f32
    %22 = vector.broadcast %cst_15 : f32 to vector<16x1xf32>
    %23 = arith.mulf %19, %22 : vector<16x1xf32>
    %24 = arith.mulf %21, %21 : vector<16x1xf32>
    %25 = arith.subf %23, %24 : vector<16x1xf32>
    %cst_16 = arith.constant 0.000000e+00 : f32
    %26 = vector.broadcast %cst_16 : f32 to vector<16x1xf32>
    %27 = arith.maximumf %25, %26 : vector<16x1xf32>
    %28 = vector.broadcast %21 : vector<16x1xf32> to vector<16x128xf32>
    %29 = arith.subf %12, %28 : vector<16x128xf32>
    %cst_17 = arith.constant 9.99999974E-6 : f32
    %30 = vector.broadcast %cst_17 : f32 to vector<16x1xf32>
    %31 = arith.addf %27, %30 : vector<16x1xf32>
    %32 = math.rsqrt %31 : vector<16x1xf32>
    %33 = vector.broadcast %32 : vector<16x1xf32> to vector<16x128xf32>
    %34 = arith.mulf %29, %33 : vector<16x128xf32>
    %35 = vector.broadcast %13 : vector<1x128xf32> to vector<16x128xf32>
    %36 = arith.mulf %34, %35 : vector<16x128xf32>
    %37 = vector.broadcast %14 : vector<1x128xf32> to vector<16x128xf32>
    %38 = arith.addf %36, %37 : vector<16x128xf32>
    %c1_18 = arith.constant 1 : index
    %c0_19 = arith.constant 0 : index
    %c0_20 = arith.constant 0 : index
    %39 = vector.load %arg3[%c1_18, %c0_19, %c0_20] : memref<4x128x128xf32, #tpu.memory_space<vmem>>, vector<1x128x128xf32>
    %40 = vector.shape_cast %39 : vector<1x128x128xf32> to vector<128x128xf32>
    %cst_21 = arith.constant dense<0.000000e+00> : vector<16x128xf32>
    %41 = tpu.matmul %38, %40, %cst_21 {dimension_numbers = #tpu.dot_dimension_numbers<[1], [0], [0], [1], [0, 0, 1, 1], [], []>} : vector<16x128xf32>, vector<128x128xf32>, vector<16x128xf32> -> vector<16x128xf32>
    %c2 = arith.constant 2 : index
    %c0_22 = arith.constant 0 : index
    %42 = vector.load %arg4[%c2, %c0_22] : memref<19x128xf32, #tpu.memory_space<vmem>>, vector<1x128xf32>
    %43 = vector.broadcast %42 : vector<1x128xf32> to vector<16x128xf32>
    %44 = arith.addf %41, %43 : vector<16x128xf32>
    %45 = math.tanh %44 : vector<16x128xf32>
    %c6 = arith.constant 6 : index
    %c0_23 = arith.constant 0 : index
    %46 = vector.load %arg4[%c6, %c0_23] : memref<19x128xf32, #tpu.memory_space<vmem>>, vector<1x128xf32>
    %c10 = arith.constant 10 : index
    %c0_24 = arith.constant 0 : index
    %47 = vector.load %arg4[%c10, %c0_24] : memref<19x128xf32, #tpu.memory_space<vmem>>, vector<1x128xf32>
    %cst_25 = arith.constant dense<0.000000e+00> : vector<16xf32>
    %48 = vector.multi_reduction <add>, %45, %cst_25 [1] : vector<16x128xf32> to vector<16xf32>
    %49 = vector.shape_cast %48 : vector<16xf32> to vector<16x1xf32>
    %50 = arith.mulf %45, %45 : vector<16x128xf32>
    %cst_26 = arith.constant dense<0.000000e+00> : vector<16xf32>
    %51 = vector.multi_reduction <add>, %50, %cst_26 [1] : vector<16x128xf32> to vector<16xf32>
    %52 = vector.shape_cast %51 : vector<16xf32> to vector<16x1xf32>
    %cst_27 = arith.constant 7.812500e-03 : f32
    %53 = vector.broadcast %cst_27 : f32 to vector<16x1xf32>
    %54 = arith.mulf %49, %53 : vector<16x1xf32>
    %cst_28 = arith.constant 7.812500e-03 : f32
    %55 = vector.broadcast %cst_28 : f32 to vector<16x1xf32>
    %56 = arith.mulf %52, %55 : vector<16x1xf32>
    %57 = arith.mulf %54, %54 : vector<16x1xf32>
    %58 = arith.subf %56, %57 : vector<16x1xf32>
    %cst_29 = arith.constant 0.000000e+00 : f32
    %59 = vector.broadcast %cst_29 : f32 to vector<16x1xf32>
    %60 = arith.maximumf %58, %59 : vector<16x1xf32>
    %61 = vector.broadcast %54 : vector<16x1xf32> to vector<16x128xf32>
    %62 = arith.subf %45, %61 : vector<16x128xf32>
    %cst_30 = arith.constant 9.99999974E-6 : f32
    %63 = vector.broadcast %cst_30 : f32 to vector<16x1xf32>
    %64 = arith.addf %60, %63 : vector<16x1xf32>
    %65 = math.rsqrt %64 : vector<16x1xf32>
    %66 = vector.broadcast %65 : vector<16x1xf32> to vector<16x128xf32>
    %67 = arith.mulf %62, %66 : vector<16x128xf32>
    %68 = vector.broadcast %46 : vector<1x128xf32> to vector<16x128xf32>
    %69 = arith.mulf %67, %68 : vector<16x128xf32>
    %70 = vector.broadcast %47 : vector<1x128xf32> to vector<16x128xf32>
    %71 = arith.addf %69, %70 : vector<16x128xf32>
    %72 = arith.addf %5, %71 : vector<16x128xf32>
    %73 = math.tanh %72 : vector<16x128xf32>
    %c13 = arith.constant 13 : index
    %c0_31 = arith.constant 0 : index
    %74 = vector.load %arg4[%c13, %c0_31] : memref<19x128xf32, #tpu.memory_space<vmem>>, vector<1x128xf32>
    %c15 = arith.constant 15 : index
    %c0_32 = arith.constant 0 : index
    %75 = vector.load %arg4[%c15, %c0_32] : memref<19x128xf32, #tpu.memory_space<vmem>>, vector<1x128xf32>
    %cst_33 = arith.constant dense<0.000000e+00> : vector<16xf32>
    %76 = vector.multi_reduction <add>, %73, %cst_33 [1] : vector<16x128xf32> to vector<16xf32>
    %77 = vector.shape_cast %76 : vector<16xf32> to vector<16x1xf32>
    %78 = arith.mulf %73, %73 : vector<16x128xf32>
    %cst_34 = arith.constant dense<0.000000e+00> : vector<16xf32>
    %79 = vector.multi_reduction <add>, %78, %cst_34 [1] : vector<16x128xf32> to vector<16xf32>
    %80 = vector.shape_cast %79 : vector<16xf32> to vector<16x1xf32>
    %cst_35 = arith.constant 7.812500e-03 : f32
    %81 = vector.broadcast %cst_35 : f32 to vector<16x1xf32>
    %82 = arith.mulf %77, %81 : vector<16x1xf32>
    %cst_36 = arith.constant 7.812500e-03 : f32
    %83 = vector.broadcast %cst_36 : f32 to vector<16x1xf32>
    %84 = arith.mulf %80, %83 : vector<16x1xf32>
    %85 = arith.mulf %82, %82 : vector<16x1xf32>
    %86 = arith.subf %84, %85 : vector<16x1xf32>
    %cst_37 = arith.constant 0.000000e+00 : f32
    %87 = vector.broadcast %cst_37 : f32 to vector<16x1xf32>
    %88 = arith.maximumf %86, %87 : vector<16x1xf32>
    %89 = vector.broadcast %82 : vector<16x1xf32> to vector<16x128xf32>
    %90 = arith.subf %73, %89 : vector<16x128xf32>
    %cst_38 = arith.constant 9.99999974E-6 : f32
    %91 = vector.broadcast %cst_38 : f32 to vector<16x1xf32>
    %92 = arith.addf %88, %91 : vector<16x1xf32>
    %93 = math.rsqrt %92 : vector<16x1xf32>
    %94 = vector.broadcast %93 : vector<16x1xf32> to vector<16x128xf32>
    %95 = arith.mulf %90, %94 : vector<16x128xf32>
    %96 = vector.broadcast %74 : vector<1x128xf32> to vector<16x128xf32>
    %97 = arith.mulf %95, %96 : vector<16x128xf32>
    %98 = vector.broadcast %75 : vector<1x128xf32> to vector<16x128xf32>
    %99 = arith.addf %97, %98 : vector<16x128xf32>
    %c2_39 = arith.constant 2 : index
    %c0_40 = arith.constant 0 : index
    %c0_41 = arith.constant 0 : index
    %100 = vector.load %arg3[%c2_39, %c0_40, %c0_41] : memref<4x128x128xf32, #tpu.memory_space<vmem>>, vector<1x128x128xf32>
    %101 = vector.shape_cast %100 : vector<1x128x128xf32> to vector<128x128xf32>
    %cst_42 = arith.constant dense<0.000000e+00> : vector<16x128xf32>
    %102 = tpu.matmul %99, %101, %cst_42 {dimension_numbers = #tpu.dot_dimension_numbers<[1], [0], [0], [1], [0, 0, 1, 1], [], []>} : vector<16x128xf32>, vector<128x128xf32>, vector<16x128xf32> -> vector<16x128xf32>
    %c3 = arith.constant 3 : index
    %c0_43 = arith.constant 0 : index
    %103 = vector.load %arg4[%c3, %c0_43] : memref<19x128xf32, #tpu.memory_space<vmem>>, vector<1x128xf32>
    %104 = vector.broadcast %103 : vector<1x128xf32> to vector<16x128xf32>
    %105 = arith.addf %102, %104 : vector<16x128xf32>
    %106 = math.tanh %105 : vector<16x128xf32>
    %c7 = arith.constant 7 : index
    %c0_44 = arith.constant 0 : index
    %107 = vector.load %arg4[%c7, %c0_44] : memref<19x128xf32, #tpu.memory_space<vmem>>, vector<1x128xf32>
    %c11 = arith.constant 11 : index
    %c0_45 = arith.constant 0 : index
    %108 = vector.load %arg4[%c11, %c0_45] : memref<19x128xf32, #tpu.memory_space<vmem>>, vector<1x128xf32>
    %cst_46 = arith.constant dense<0.000000e+00> : vector<16xf32>
    %109 = vector.multi_reduction <add>, %106, %cst_46 [1] : vector<16x128xf32> to vector<16xf32>
    %110 = vector.shape_cast %109 : vector<16xf32> to vector<16x1xf32>
    %111 = arith.mulf %106, %106 : vector<16x128xf32>
    %cst_47 = arith.constant dense<0.000000e+00> : vector<16xf32>
    %112 = vector.multi_reduction <add>, %111, %cst_47 [1] : vector<16x128xf32> to vector<16xf32>
    %113 = vector.shape_cast %112 : vector<16xf32> to vector<16x1xf32>
    %cst_48 = arith.constant 7.812500e-03 : f32
    %114 = vector.broadcast %cst_48 : f32 to vector<16x1xf32>
    %115 = arith.mulf %110, %114 : vector<16x1xf32>
    %cst_49 = arith.constant 7.812500e-03 : f32
    %116 = vector.broadcast %cst_49 : f32 to vector<16x1xf32>
    %117 = arith.mulf %113, %116 : vector<16x1xf32>
    %118 = arith.mulf %115, %115 : vector<16x1xf32>
    %119 = arith.subf %117, %118 : vector<16x1xf32>
    %cst_50 = arith.constant 0.000000e+00 : f32
    %120 = vector.broadcast %cst_50 : f32 to vector<16x1xf32>
    %121 = arith.maximumf %119, %120 : vector<16x1xf32>
    %122 = vector.broadcast %115 : vector<16x1xf32> to vector<16x128xf32>
    %123 = arith.subf %106, %122 : vector<16x128xf32>
    %cst_51 = arith.constant 9.99999974E-6 : f32
    %124 = vector.broadcast %cst_51 : f32 to vector<16x1xf32>
    %125 = arith.addf %121, %124 : vector<16x1xf32>
    %126 = math.rsqrt %125 : vector<16x1xf32>
    %127 = vector.broadcast %126 : vector<16x1xf32> to vector<16x128xf32>
    %128 = arith.mulf %123, %127 : vector<16x128xf32>
    %129 = vector.broadcast %107 : vector<1x128xf32> to vector<16x128xf32>
    %130 = arith.mulf %128, %129 : vector<16x128xf32>
    %131 = vector.broadcast %108 : vector<1x128xf32> to vector<16x128xf32>
    %132 = arith.addf %130, %131 : vector<16x128xf32>
    %c3_52 = arith.constant 3 : index
    %c0_53 = arith.constant 0 : index
    %c0_54 = arith.constant 0 : index
    %133 = vector.load %arg3[%c3_52, %c0_53, %c0_54] : memref<4x128x128xf32, #tpu.memory_space<vmem>>, vector<1x128x128xf32>
    %134 = vector.shape_cast %133 : vector<1x128x128xf32> to vector<128x128xf32>
    %cst_55 = arith.constant dense<0.000000e+00> : vector<16x128xf32>
    %135 = tpu.matmul %132, %134, %cst_55 {dimension_numbers = #tpu.dot_dimension_numbers<[1], [0], [0], [1], [0, 0, 1, 1], [], []>} : vector<16x128xf32>, vector<128x128xf32>, vector<16x128xf32> -> vector<16x128xf32>
    %c4 = arith.constant 4 : index
    %c0_56 = arith.constant 0 : index
    %136 = vector.load %arg4[%c4, %c0_56] : memref<19x128xf32, #tpu.memory_space<vmem>>, vector<1x128xf32>
    %137 = vector.broadcast %136 : vector<1x128xf32> to vector<16x128xf32>
    %138 = arith.addf %135, %137 : vector<16x128xf32>
    %139 = math.tanh %138 : vector<16x128xf32>
    %c8 = arith.constant 8 : index
    %c0_57 = arith.constant 0 : index
    %140 = vector.load %arg4[%c8, %c0_57] : memref<19x128xf32, #tpu.memory_space<vmem>>, vector<1x128xf32>
    %c12 = arith.constant 12 : index
    %c0_58 = arith.constant 0 : index
    %141 = vector.load %arg4[%c12, %c0_58] : memref<19x128xf32, #tpu.memory_space<vmem>>, vector<1x128xf32>
    %cst_59 = arith.constant dense<0.000000e+00> : vector<16xf32>
    %142 = vector.multi_reduction <add>, %139, %cst_59 [1] : vector<16x128xf32> to vector<16xf32>
    %143 = vector.shape_cast %142 : vector<16xf32> to vector<16x1xf32>
    %144 = arith.mulf %139, %139 : vector<16x128xf32>
    %cst_60 = arith.constant dense<0.000000e+00> : vector<16xf32>
    %145 = vector.multi_reduction <add>, %144, %cst_60 [1] : vector<16x128xf32> to vector<16xf32>
    %146 = vector.shape_cast %145 : vector<16xf32> to vector<16x1xf32>
    %cst_61 = arith.constant 7.812500e-03 : f32
    %147 = vector.broadcast %cst_61 : f32 to vector<16x1xf32>
    %148 = arith.mulf %143, %147 : vector<16x1xf32>
    %cst_62 = arith.constant 7.812500e-03 : f32
    %149 = vector.broadcast %cst_62 : f32 to vector<16x1xf32>
    %150 = arith.mulf %146, %149 : vector<16x1xf32>
    %151 = arith.mulf %148, %148 : vector<16x1xf32>
    %152 = arith.subf %150, %151 : vector<16x1xf32>
    %cst_63 = arith.constant 0.000000e+00 : f32
    %153 = vector.broadcast %cst_63 : f32 to vector<16x1xf32>
    %154 = arith.maximumf %152, %153 : vector<16x1xf32>
    %155 = vector.broadcast %148 : vector<16x1xf32> to vector<16x128xf32>
    %156 = arith.subf %139, %155 : vector<16x128xf32>
    %cst_64 = arith.constant 9.99999974E-6 : f32
    %157 = vector.broadcast %cst_64 : f32 to vector<16x1xf32>
    %158 = arith.addf %154, %157 : vector<16x1xf32>
    %159 = math.rsqrt %158 : vector<16x1xf32>
    %160 = vector.broadcast %159 : vector<16x1xf32> to vector<16x128xf32>
    %161 = arith.mulf %156, %160 : vector<16x128xf32>
    %162 = vector.broadcast %140 : vector<1x128xf32> to vector<16x128xf32>
    %163 = arith.mulf %161, %162 : vector<16x128xf32>
    %164 = vector.broadcast %141 : vector<1x128xf32> to vector<16x128xf32>
    %165 = arith.addf %163, %164 : vector<16x128xf32>
    %166 = arith.addf %99, %165 : vector<16x128xf32>
    %167 = math.tanh %166 : vector<16x128xf32>
    %c14 = arith.constant 14 : index
    %c0_65 = arith.constant 0 : index
    %168 = vector.load %arg4[%c14, %c0_65] : memref<19x128xf32, #tpu.memory_space<vmem>>, vector<1x128xf32>
    %c16 = arith.constant 16 : index
    %c0_66 = arith.constant 0 : index
    %169 = vector.load %arg4[%c16, %c0_66] : memref<19x128xf32, #tpu.memory_space<vmem>>, vector<1x128xf32>
    %cst_67 = arith.constant dense<0.000000e+00> : vector<16xf32>
    %170 = vector.multi_reduction <add>, %167, %cst_67 [1] : vector<16x128xf32> to vector<16xf32>
    %171 = vector.shape_cast %170 : vector<16xf32> to vector<16x1xf32>
    %172 = arith.mulf %167, %167 : vector<16x128xf32>
    %cst_68 = arith.constant dense<0.000000e+00> : vector<16xf32>
    %173 = vector.multi_reduction <add>, %172, %cst_68 [1] : vector<16x128xf32> to vector<16xf32>
    %174 = vector.shape_cast %173 : vector<16xf32> to vector<16x1xf32>
    %cst_69 = arith.constant 7.812500e-03 : f32
    %175 = vector.broadcast %cst_69 : f32 to vector<16x1xf32>
    %176 = arith.mulf %171, %175 : vector<16x1xf32>
    %cst_70 = arith.constant 7.812500e-03 : f32
    %177 = vector.broadcast %cst_70 : f32 to vector<16x1xf32>
    %178 = arith.mulf %174, %177 : vector<16x1xf32>
    %179 = arith.mulf %176, %176 : vector<16x1xf32>
    %180 = arith.subf %178, %179 : vector<16x1xf32>
    %cst_71 = arith.constant 0.000000e+00 : f32
    %181 = vector.broadcast %cst_71 : f32 to vector<16x1xf32>
    %182 = arith.maximumf %180, %181 : vector<16x1xf32>
    %183 = vector.broadcast %176 : vector<16x1xf32> to vector<16x128xf32>
    %184 = arith.subf %167, %183 : vector<16x128xf32>
    %cst_72 = arith.constant 9.99999974E-6 : f32
    %185 = vector.broadcast %cst_72 : f32 to vector<16x1xf32>
    %186 = arith.addf %182, %185 : vector<16x1xf32>
    %187 = math.rsqrt %186 : vector<16x1xf32>
    %188 = vector.broadcast %187 : vector<16x1xf32> to vector<16x128xf32>
    %189 = arith.mulf %184, %188 : vector<16x128xf32>
    %190 = vector.broadcast %168 : vector<1x128xf32> to vector<16x128xf32>
    %191 = arith.mulf %189, %190 : vector<16x128xf32>
    %192 = vector.broadcast %169 : vector<1x128xf32> to vector<16x128xf32>
    %193 = arith.addf %191, %192 : vector<16x128xf32>
    %c17 = arith.constant 17 : index
    %c0_73 = arith.constant 0 : index
    %194 = vector.load %arg4[%c17, %c0_73] : memref<19x128xf32, #tpu.memory_space<vmem>>, vector<1x128xf32>
    %c18 = arith.constant 18 : index
    %c0_74 = arith.constant 0 : index
    %195 = vector.load %arg4[%c18, %c0_74] : memref<19x128xf32, #tpu.memory_space<vmem>>, vector<1x1xf32>
    %196 = vector.broadcast %194 : vector<1x128xf32> to vector<16x128xf32>
    %197 = arith.mulf %193, %196 : vector<16x128xf32>
    %cst_75 = arith.constant dense<0.000000e+00> : vector<16xf32>
    %198 = vector.multi_reduction <add>, %197, %cst_75 [1] : vector<16x128xf32> to vector<16xf32>
    %199 = vector.shape_cast %198 : vector<16xf32> to vector<16x1xf32>
    %200 = vector.broadcast %195 : vector<1x1xf32> to vector<16x1xf32>
    %201 = arith.addf %199, %200 : vector<16x1xf32>
    %202 = arith.negf %201 : vector<16x1xf32>
    %203 = math.exp %202 : vector<16x1xf32>
    %cst_76 = arith.constant 1.000000e+00 : f32
    %204 = vector.broadcast %cst_76 : f32 to vector<16x1xf32>
    %205 = arith.addf %204, %203 : vector<16x1xf32>
    %206 = arith.divf %204, %205 : vector<16x1xf32>
    %207 = vector.shape_cast %206 : vector<16x1xf32> to vector<16x1xf32>
    %208 = vector.broadcast %207 : vector<16x1xf32> to vector<16x128xf32>
    %c0_77 = arith.constant 0 : index
    %c0_78 = arith.constant 0 : index
    %209 = vector.load %arg5[%c0_77, %c0_78] : memref<16x128xf32, #tpu.memory_space<vmem>>, vector<16x128xf32>
    tpu.vector_store %arg5[%c0_77, %c0_78], %208 {strides = array<i32>} : memref<16x128xf32, #tpu.memory_space<vmem>>, vector<16x128xf32>,
    return
  }
  func.func @transform_0(%arg0: i32) -> (i32, i32) {
    %c0_i32 = arith.constant 0 : i32
    %c0_i32_0 = arith.constant 0 : i32
    return %arg0, %c0_i32 : i32, i32
  }
  func.func @transform_1(%arg0: i32) -> (i32, i32) {
    %c0_i32 = arith.constant 0 : i32
    %c0_i32_0 = arith.constant 0 : i32
    %c0_i32_1 = arith.constant 0 : i32
    return %c0_i32, %c0_i32_0 : i32, i32
  }
  func.func @transform_2(%arg0: i32) -> (i32, i32, i32) {
    %c0_i32 = arith.constant 0 : i32
    %c0_i32_0 = arith.constant 0 : i32
    %c0_i32_1 = arith.constant 0 : i32
    %c0_i32_2 = arith.constant 0 : i32
    return %c0_i32, %c0_i32_0, %c0_i32_1 : i32, i32, i32
  }
  func.func @transform_3(%arg0: i32) -> (i32, i32) {
    %c0_i32 = arith.constant 0 : i32
    %c0_i32_0 = arith.constant 0 : i32
    %c0_i32_1 = arith.constant 0 : i32
    return %c0_i32, %c0_i32_0 : i32, i32
  }
  func.func @transform_4(%arg0: i32) -> (i32, i32) {
    %c0_i32 = arith.constant 0 : i32
    %c0_i32_0 = arith.constant 0 : i32
    return %arg0, %c0_i32 : i32, i32
  }
}

</mosaic_0001>

<llo_original>
// kernel: pure_res_dnn_classification.1
$region0: #{pure_res_dnn_classification.1}
  #allocation0 [shape = 'u32[]', space=smem, size = 0x4, offset = 0x4, fixed_abs, tag = 'smem constant byte address 0x4 - core index']
  #allocation1 [shape = 'u32[144,128]{1,0:T(1,128)}', space=vmem, size = 0x12000, scoped, tag = 'internal scratch']
  %s0 = inlined_call_operand.hbm [shape: f32[16,64], index: 0, kind: input, shape index: {}]
  %s1 = inlined_call_operand.hbm [shape: f32[64,128], index: 1, kind: input, shape index: {}]
  %s2 = inlined_call_operand.hbm [shape: f32[4,128,128], index: 2, kind: input, shape index: {}]
  %s3 = inlined_call_operand.hbm [shape: f32[19,128], index: 3, kind: input, shape index: {}]
  %s4 = inlined_call_operand.vmem [shape: f32[16,128], index: 4, kind: output, shape index: {}]
  %s5 = sld [smem:[#allocation0]]
  $region42: #{pure_res_dnn_classification.1} parent=0
    _
  %s7 = ssub.s32 1, %s5
  %s8 = scalar_select 0, %s7, %s5
  $region1: #{pure_res_dnn_classification.1} parent=0
    #allocation2 [shape = 'u8[8192]{0}', space=vmem, size = 0x2000, scoped, tag = 'input window, operand 0, single buffered']
    #allocation3 [shape = 's32[1]{0}', space=sflag, size = 0x4, scoped, tag = 'scoped memory for pure_res_dnn_classification.1']
    #allocation4 [shape = 'u8[32768]{0}', space=vmem, size = 0x8000, scoped, tag = 'input window, operand 1, single buffered']
    #allocation5 [shape = 's32[1]{0}', space=sflag, size = 0x4, scoped, tag = 'scoped memory for pure_res_dnn_classification.1']
    #allocation6 [shape = 'u8[262144]{0}', space=vmem, size = 0x40000, scoped, tag = 'input window, operand 2, single buffered']
    #allocation7 [shape = 'u8[12288]{0}', space=vmem, size = 0x3000, scoped, tag = 'input window, operand 3, single buffered']
    #allocation8 [shape = 's32[1]{0}', space=sflag, size = 0x4, scoped, tag = 'scoped memory for pure_res_dnn_classification.1']
    %9 = vsyncpa [#allocation3], 0
    %10 = vsyncpa [#allocation5], 0
    %11 = vsyncpa [#allocation8], 0
    // Predicated region
    $region2: #{pure_res_dnn_classification.1} parent=1 // pred_check
      _
    $region3: #{pure_res_dnn_classification.1} parent=1 // pred_check_branch
      %13 = sbr.rel (0) target = $region5
    $region4: #{pure_res_dnn_classification.1} parent=1 // pred_region
      %s15 = ssub.s32 256, 256
      %16 = vsyncadd [#allocation3], %s15
      %s17 = sshll.u32 [#allocation2], 4
      %s18 = int_to_ptr.vmem [resolvable:$true] %s17
      %23 = dma.hbm_to_vmem [thread:$0]  %s0, 256, %s18, [#allocation3], 128, 128, 8
    $region5: #{pure_res_dnn_classification.1} parent=1 // pred_fallthru
      _
    // Predicated region
    $region6: #{pure_res_dnn_classification.1} parent=1 // pred_check
      _
    $region7: #{pure_res_dnn_classification.1} parent=1 // pred_check_branch
      %25 = sbr.rel (0) target = $region9
    $region8: #{pure_res_dnn_classification.1} parent=1 // pred_region
      %s27 = ssub.s32 1024, 1024
      %28 = vsyncadd [#allocation5], %s27
      %s29 = sshll.u32 [#allocation4], 4
      %s30 = int_to_ptr.vmem [resolvable:$true] %s29
      %35 = dma.hbm_to_vmem [thread:$0]  %s1, 1024, %s30, [#allocation5], 128, 128, 8
    $region9: #{pure_res_dnn_classification.1} parent=1 // pred_fallthru
      _
    // Predicated region
    $region10: #{pure_res_dnn_classification.1} parent=1 // pred_check
      _
    $region11: #{pure_res_dnn_classification.1} parent=1 // pred_check_branch
      %37 = sbr.rel (0) target = $region13
    $region12: #{pure_res_dnn_classification.1} parent=1 // pred_region
      %s39 = ssub.s32 8192, 8192
      %40 = vsyncadd [#allocation5], %s39
      %s41 = sshll.u32 [#allocation6], 4
      %s42 = int_to_ptr.vmem [resolvable:$true] %s41
      %47 = dma.hbm_to_vmem [thread:$0]  %s2, 8192, %s42, [#allocation5], 128, 128, 8
    $region13: #{pure_res_dnn_classification.1} parent=1 // pred_fallthru
      _
    // Predicated region
    $region14: #{pure_res_dnn_classification.1} parent=1 // pred_check
      _
    $region15: #{pure_res_dnn_classification.1} parent=1 // pred_check_branch
      %49 = sbr.rel (0) target = $region17
    $region16: #{pure_res_dnn_classification.1} parent=1 // pred_region
      %s51 = ssub.s32 384, 384
      %52 = vsyncadd [#allocation8], %s51
      %s53 = sshll.u32 [#allocation7], 4
      %s54 = int_to_ptr.vmem [resolvable:$true] %s53
      %59 = dma.hbm_to_vmem [thread:$0]  %s3, 384, %s54, [#allocation8], 128, 128, 8
    $region17: #{pure_res_dnn_classification.1} parent=1 // pred_fallthru
      _
    // Predicated region
    $region18: #{pure_res_dnn_classification.1} parent=1 // pred_check
      _
    $region19: #{pure_res_dnn_classification.1} parent=1 // pred_check_branch
      %61 = sbr.rel (0) target = $region21
    $region20: #{pure_res_dnn_classification.1} parent=1 // pred_region
      %62 = dma.done [#allocation3], 256
    $region21: #{pure_res_dnn_classification.1} parent=1 // pred_fallthru
      _
    // Predicated region
    $region22: #{pure_res_dnn_classification.1} parent=1 // pred_check
      _
    $region23: #{pure_res_dnn_classification.1} parent=1 // pred_check_branch
      %64 = sbr.rel (0) target = $region25
    $region24: #{pure_res_dnn_classification.1} parent=1 // pred_region
      %65 = dma.done [#allocation5], 1024
    $region25: #{pure_res_dnn_classification.1} parent=1 // pred_fallthru
      _
    // Predicated region
    $region26: #{pure_res_dnn_classification.1} parent=1 // pred_check
      _
    $region27: #{pure_res_dnn_classification.1} parent=1 // pred_check_branch
      %67 = sbr.rel (0) target = $region29
    $region28: #{pure_res_dnn_classification.1} parent=1 // pred_region
      %68 = dma.done [#allocation5], 8192
    $region29: #{pure_res_dnn_classification.1} parent=1 // pred_fallthru
      _
    // Predicated region
    $region30: #{pure_res_dnn_classification.1} parent=1 // pred_check
      _
    $region31: #{pure_res_dnn_classification.1} parent=1 // pred_check_branch
      %70 = sbr.rel (0) target = $region33
    $region32: #{pure_res_dnn_classification.1} parent=1 // pred_region
      %71 = dma.done [#allocation8], 384
    $region33: #{pure_res_dnn_classification.1} parent=1 // pred_fallthru
      _
    %v72 = vld [vmem:[#allocation2] sm:$0xff]
    %v73 = vld [vmem:[#allocation2 + $0x8] sm:$0xff]
    %v74 = vld [vmem:[#allocation4] sm:$0xff]
    %v75 = vld [vmem:[#allocation4 + $0x8] sm:$0xff]
    %v76 = vld [vmem:[#allocation4 + $0x10] sm:$0xff]
    %v77 = vld [vmem:[#allocation4 + $0x18] sm:$0xff]
    %v78 = vld [vmem:[#allocation4 + $0x20] sm:$0xff]
    %v79 = vld [vmem:[#allocation4 + $0x28] sm:$0xff]
    %v80 = vld [vmem:[#allocation4 + $0x30] sm:$0xff]
    %v81 = vld [vmem:[#allocation4 + $0x38] sm:$0xff]
    %v82 = vld [vmem:[#allocation7] sm:$0x1]
    %v83 = vlaneseq
    %v84 = vshrl.u32 %v83, 7
    %v85 = vsub.s32 0, %v84
    %v86 = vrot.slane %v82, %v85
    %vm87 = vcmask 523264
    %v89 = vsel %vm87, %v72, 0
    %v92 = vsel %vm87, %v73, 0
    %94 = vmatprep.subr.mxu0 0.0
    %95 = vmatpush1.msra.mxu0 %v74
    %96 = vmatprep.subr.mxu0 0.0
    %97 = vmatpush1.msra.mxu0 %v75
    %98 = vmatprep.subr.mxu0 0.0
    %99 = vmatpush1.msra.mxu0 %v76
    %100 = vmatprep.subr.mxu0 0.0
    %101 = vmatpush1.msra.mxu0 %v77
    %102 = vmatprep.subr.mxu0 0.0
    %103 = vmatpush1.msra.mxu0 %v78
    %104 = vmatprep.subr.mxu0 0.0
    %105 = vmatpush1.msra.mxu0 %v79
    %106 = vmatprep.subr.mxu0 0.0
    %107 = vmatpush1.msra.mxu0 %v80
    %108 = vmatprep.subr.mxu0 0.0
    %109 = vmatpush1.msra.mxu0 %v81
    %110 = vmatprep.subr.mxu0 0.0
    %111 = vmatpush1.msra.mxu0 0.0
    %112 = vmatprep.subr.mxu0 0.0
    %113 = vmatpush1.msra.mxu0 0.0
    %114 = vmatprep.subr.mxu0 0.0
    %115 = vmatpush1.msra.mxu0 0.0
    %116 = vmatprep.subr.mxu0 0.0
    %117 = vmatpush1.msra.mxu0 0.0
    %118 = vmatprep.subr.mxu0 0.0
    %119 = vmatpush1.msra.mxu0 0.0
    %120 = vmatprep.subr.mxu0 0.0
    %121 = vmatpush1.msra.mxu0 0.0
    %122 = vmatprep.subr.mxu0 0.0
    %123 = vmatpush1.msra.mxu0 0.0
    %124 = vmatprep.subr.mxu0 0.0
    %125 = vmatpush1.msra.mxu0 0.0
    %126 = vmatprep.subr.mxu0 0.0
    %127 = vmatpush1.msra.mxu0 0.0
    %128 = vmatprep.subr.mxu0 0.0
    %129 = vmatpush1.msra.mxu0 0.0
    %130 = vmatprep.subr.mxu0 0.0
    %131 = vmatpush1.msra.mxu0 0.0
    %132 = vmatprep.subr.mxu0 0.0
    %133 = vmatpush1.msra.mxu0 0.0
    %134 = vmatprep.subr.mxu0 0.0
    %135 = vmatpush1.msra.mxu0 0.0
    %136 = vmatprep.subr.mxu0 0.0
    %137 = vmatpush1.msra.mxu0 0.0
    %138 = vmatprep.subr.mxu0 0.0
    %139 = vmatpush1.msra.mxu0 0.0
    %140 = vmatprep.subr.mxu0 0.0
    %141 = vmatpush1.msra.mxu0 0.0
    %142 = vmatprep.subr.mxu0 0.0
    %143 = vmatpush1.msra.mxu0 0.0
    %144 = vmatprep.subr.mxu0 0.0
    %145 = vmatpush1.msra.mxu0 0.0
    %146 = vmatprep.subr.mxu0 0.0
    %147 = vmatpush1.msra.mxu0 0.0
    %148 = vmatprep.subr.mxu0 0.0
    %149 = vmatpush1.msra.mxu0 0.0
    %150 = vmatprep.subr.mxu0 0.0
    %151 = vmatpush1.msra.mxu0 0.0
    %152 = vmatprep.subr.mxu0 0.0
    %153 = vmatpush1.msra.mxu0 0.0
    %154 = vmatprep.subr.mxu0 0.0
    %155 = vmatpush1.msra.mxu0 0.0
    %156 = vmatprep.subr.mxu0 0.0
    %157 = vmatpush1.msra.mxu0 0.0
    %158 = vmatprep.mubr.f32.mxu0 0.0
    %159 = vmatmul.mubr.f32.gmra.mrb[0].mxu0 %v89
    %v160 = vpop.f32.mrb[0].mxu0
    %v161 = vadd.f32 %v86, %v160
    %v162 = vpop.f32.mrb[0].mxu0
    %163 = vmatprep.mubr.f32.mxu0 0.0
    %164 = vmatmul.mubr.f32.gmra.mrb[0].mxu0 %v92
    %v165 = vpop.f32.mrb[0].mxu0
    %v166 = vadd.f32 %v86, %v165
    %v167 = vpop.f32.mrb[0].mxu0
    %168 = vdwg.mxu0
    %v169 = vld [vmem:[#allocation6] sm:$0xff]
    %v170 = vld [vmem:[#allocation6 + $0x8] sm:$0xff]
    %v171 = vld [vmem:[#allocation6 + $0x10] sm:$0xff]
    %v172 = vld [vmem:[#allocation6 + $0x18] sm:$0xff]
    %v173 = vld [vmem:[#allocation6 + $0x20] sm:$0xff]
    %v174 = vld [vmem:[#allocation6 + $0x28] sm:$0xff]
    %v175 = vld [vmem:[#allocation6 + $0x30] sm:$0xff]
    %v176 = vld [vmem:[#allocation6 + $0x38] sm:$0xff]
    %v177 = vld [vmem:[#allocation6 + $0x40] sm:$0xff]
    %v178 = vld [vmem:[#allocation6 + $0x48] sm:$0xff]
    %v179 = vld [vmem:[#allocation6 + $0x50] sm:$0xff]
    %v180 = vld [vmem:[#allocation6 + $0x58] sm:$0xff]
    %v181 = vld [vmem:[#allocation6 + $0x60] sm:$0xff]
    %v182 = vld [vmem:[#allocation6 + $0x68] sm:$0xff]
    %v183 = vld [vmem:[#allocation6 + $0x70] sm:$0xff]
    %v184 = vld [vmem:[#allocation6 + $0x78] sm:$0xff]
    %v185 = vld [vmem:[#allocation7 + $0x1] sm:$0x1]
    %v186 = vlaneseq
    %v187 = vshrl.u32 %v186, 7
    %v188 = vsub.s32 0, %v187
    %v189 = vrot.slane %v185, %v188
    %190 = vmatprep.subr.mxu0 0.0
    %191 = vmatpush1.msra.mxu0 %v169
    %192 = vmatprep.subr.mxu0 0.0
    %193 = vmatpush1.msra.mxu0 %v170
    %194 = vmatprep.subr.mxu0 0.0
    %195 = vmatpush1.msra.mxu0 %v171
    %196 = vmatprep.subr.mxu0 0.0
    %197 = vmatpush1.msra.mxu0 %v172
    %198 = vmatprep.subr.mxu0 0.0
    %199 = vmatpush1.msra.mxu0 %v173
    %200 = vmatprep.subr.mxu0 0.0
    %201 = vmatpush1.msra.mxu0 %v174
    %202 = vmatprep.subr.mxu0 0.0
    %203 = vmatpush1.msra.mxu0 %v175
    %204 = vmatprep.subr.mxu0 0.0
    %205 = vmatpush1.msra.mxu0 %v176
    %206 = vmatprep.subr.mxu0 0.0
    %207 = vmatpush1.msra.mxu0 %v177
    %208 = vmatprep.subr.mxu0 0.0
    %209 = vmatpush1.msra.mxu0 %v178
    %210 = vmatprep.subr.mxu0 0.0
    %211 = vmatpush1.msra.mxu0 %v179
    %212 = vmatprep.subr.mxu0 0.0
    %213 = vmatpush1.msra.mxu0 %v180
    %214 = vmatprep.subr.mxu0 0.0
    %215 = vmatpush1.msra.mxu0 %v181
    %216 = vmatprep.subr.mxu0 0.0
    %217 = vmatpush1.msra.mxu0 %v182
    %218 = vmatprep.subr.mxu0 0.0
    %219 = vmatpush1.msra.mxu0 %v183
    %220 = vmatprep.subr.mxu0 0.0
    %221 = vmatpush1.msra.mxu0 %v184
    %222 = vmatprep.subr.mxu0 0.0
    %223 = vmatpush1.msra.mxu0 0.0
    %224 = vmatprep.subr.mxu0 0.0
    %225 = vmatpush1.msra.mxu0 0.0
    %226 = vmatprep.subr.mxu0 0.0
    %227 = vmatpush1.msra.mxu0 0.0
    %228 = vmatprep.subr.mxu0 0.0
    %229 = vmatpush1.msra.mxu0 0.0
    %230 = vmatprep.subr.mxu0 0.0
    %231 = vmatpush1.msra.mxu0 0.0
    %232 = vmatprep.subr.mxu0 0.0
    %233 = vmatpush1.msra.mxu0 0.0
    %234 = vmatprep.subr.mxu0 0.0
    %235 = vmatpush1.msra.mxu0 0.0
    %236 = vmatprep.subr.mxu0 0.0
    %237 = vmatpush1.msra.mxu0 0.0
    %238 = vmatprep.subr.mxu0 0.0
    %239 = vmatpush1.msra.mxu0 0.0
    %240 = vmatprep.subr.mxu0 0.0
    %241 = vmatpush1.msra.mxu0 0.0
    %242 = vmatprep.subr.mxu0 0.0
    %243 = vmatpush1.msra.mxu0 0.0
    %244 = vmatprep.subr.mxu0 0.0
    %245 = vmatpush1.msra.mxu0 0.0
    %246 = vmatprep.subr.mxu0 0.0
    %247 = vmatpush1.msra.mxu0 0.0
    %248 = vmatprep.subr.mxu0 0.0
    %249 = vmatpush1.msra.mxu0 0.0
    %250 = vmatprep.subr.mxu0 0.0
    %251 = vmatpush1.msra.mxu0 0.0
    %252 = vmatprep.subr.mxu0 0.0
    %253 = vmatpush1.msra.mxu0 0.0
    %254 = vmatprep.mubr.f32.mxu0 0.0
    %255 = vmatmul.mubr.f32.gmra.mrb[0].mxu0 %v161
    %v256 = vpop.f32.mrb[0].mxu0
    %v257 = vadd.f32 %v189, %v256
    %v258 = vpop.f32.mrb[0].mxu0
    %259 = vmatprep.mubr.f32.mxu0 0.0
    %260 = vmatmul.mubr.f32.gmra.mrb[0].mxu0 %v166
    %v261 = vpop.f32.mrb[0].mxu0
    %v262 = vadd.f32 %v189, %v261
    %v263 = vpop.f32.mrb[0].mxu0
    %264 = vdwg.mxu0
    %v265 = vtanh.pop %v257
    %v266 = vtanh.pop %v262
    %v267 = vld [vmem:[#allocation7 + $0x5] sm:$0x1]
    %v268 = vld [vmem:[#allocation7 + $0x9] sm:$0x1]
    %269 = vadd.xlane.f32.xlu0 %v265
    %v270 = vpop.xlane.xlu0 %269
    %271 = vadd.xlane.f32.xlu0 %v266
    %v272 = vpop.xlane.xlu0 %271
    %v273 = vmul.f32 %v265, %v265
    %v274 = vmul.f32 %v266, %v266
    %275 = vadd.xlane.f32.xlu0 %v273
    %v276 = vpop.xlane.xlu0 %275
    %277 = vadd.xlane.f32.xlu0 %v274
    %v278 = vpop.xlane.xlu0 %277
    %v279 = vmul.f32 %v270, 0.0078125
    %v280 = vmul.f32 %v272, 0.0078125
    %v281 = vmul.f32 %v276, 0.0078125
    %v282 = vmul.f32 %v278, 0.0078125
    %v283 = vmul.f32 %v279, %v279
    %v284 = vmul.f32 %v280, %v280
    %v285 = vsub.f32 %v281, %v283
    %v286 = vsub.f32 %v282, %v284
    %v287 = vmax.f32 %v285, 0.0
    %v288 = vmax.f32 %v286, 0.0
    %v289 = vsub.f32 %v265, %v279
    %v290 = vsub.f32 %v266, %v280
    %v291 = vadd.f32 %v287, 1e-05
    %v292 = vadd.f32 %v288, 1e-05
    %v293 = vrsqrt.pop %v291
    %v294 = vrsqrt.pop %v292
    %v295 = vmul.f32 %v289, %v293
    %v296 = vmul.f32 %v290, %v294
    %v297 = vlaneseq
    %v298 = vshrl.u32 %v297, 7
    %v299 = vsub.s32 0, %v298
    %v300 = vrot.slane %v267, %v299
    %v301 = vmul.f32 %v295, %v300
    %v302 = vmul.f32 %v296, %v300
    %v303 = vlaneseq
    %v304 = vshrl.u32 %v303, 7
    %v305 = vsub.s32 0, %v304
    %v306 = vrot.slane %v268, %v305
    %v307 = vadd.f32 %v301, %v306
    %v308 = vadd.f32 %v302, %v306
    %s309 = scalar_lea.vmem [#allocation6], 128
    %v310 = vld [vmem:[%s309] sm:$0xff]
    %v311 = vld [vmem:[%s309 + $0x8] sm:$0xff]
    %v312 = vld [vmem:[%s309 + $0x10] sm:$0xff]
    %v313 = vld [vmem:[%s309 + $0x18] sm:$0xff]
    %v314 = vld [vmem:[%s309 + $0x20] sm:$0xff]
    %v315 = vld [vmem:[%s309 + $0x28] sm:$0xff]
    %v316 = vld [vmem:[%s309 + $0x30] sm:$0xff]
    %v317 = vld [vmem:[%s309 + $0x38] sm:$0xff]
    %v318 = vld [vmem:[%s309 + $0x40] sm:$0xff]
    %v319 = vld [vmem:[%s309 + $0x48] sm:$0xff]
    %v320 = vld [vmem:[%s309 + $0x50] sm:$0xff]
    %v321 = vld [vmem:[%s309 + $0x58] sm:$0xff]
    %v322 = vld [vmem:[%s309 + $0x60] sm:$0xff]
    %v323 = vld [vmem:[%s309 + $0x68] sm:$0xff]
    %v324 = vld [vmem:[%s309 + $0x70] sm:$0xff]
    %v325 = vld [vmem:[%s309 + $0x78] sm:$0xff]
    %v326 = vld [vmem:[#allocation7 + $0x2] sm:$0x1]
    %v327 = vlaneseq
    %v328 = vshrl.u32 %v327, 7
    %v329 = vsub.s32 0, %v328
    %v330 = vrot.slane %v326, %v329
    %331 = vmatprep.subr.mxu0 0.0
    %332 = vmatpush1.msra.mxu0 %v310
    %333 = vmatprep.subr.mxu0 0.0
    %334 = vmatpush1.msra.mxu0 %v311
    %335 = vmatprep.subr.mxu0 0.0
    %336 = vmatpush1.msra.mxu0 %v312
    %337 = vmatprep.subr.mxu0 0.0
    %338 = vmatpush1.msra.mxu0 %v313
    %339 = vmatprep.subr.mxu0 0.0
    %340 = vmatpush1.msra.mxu0 %v314
    %341 = vmatprep.subr.mxu0 0.0
    %342 = vmatpush1.msra.mxu0 %v315
    %343 = vmatprep.subr.mxu0 0.0
    %344 = vmatpush1.msra.mxu0 %v316
    %345 = vmatprep.subr.mxu0 0.0
    %346 = vmatpush1.msra.mxu0 %v317
    %347 = vmatprep.subr.mxu0 0.0
    %348 = vmatpush1.msra.mxu0 %v318
    %349 = vmatprep.subr.mxu0 0.0
    %350 = vmatpush1.msra.mxu0 %v319
    %351 = vmatprep.subr.mxu0 0.0
    %352 = vmatpush1.msra.mxu0 %v320
    %353 = vmatprep.subr.mxu0 0.0
    %354 = vmatpush1.msra.mxu0 %v321
    %355 = vmatprep.subr.mxu0 0.0
    %356 = vmatpush1.msra.mxu0 %v322
    %357 = vmatprep.subr.mxu0 0.0
    %358 = vmatpush1.msra.mxu0 %v323
    %359 = vmatprep.subr.mxu0 0.0
    %360 = vmatpush1.msra.mxu0 %v324
    %361 = vmatprep.subr.mxu0 0.0
    %362 = vmatpush1.msra.mxu0 %v325
    %363 = vmatprep.subr.mxu0 0.0
    %364 = vmatpush1.msra.mxu0 0.0
    %365 = vmatprep.subr.mxu0 0.0
    %366 = vmatpush1.msra.mxu0 0.0
    %367 = vmatprep.subr.mxu0 0.0
    %368 = vmatpush1.msra.mxu0 0.0
    %369 = vmatprep.subr.mxu0 0.0
    %370 = vmatpush1.msra.mxu0 0.0
    %371 = vmatprep.subr.mxu0 0.0
    %372 = vmatpush1.msra.mxu0 0.0
    %373 = vmatprep.subr.mxu0 0.0
    %374 = vmatpush1.msra.mxu0 0.0
    %375 = vmatprep.subr.mxu0 0.0
    %376 = vmatpush1.msra.mxu0 0.0
    %377 = vmatprep.subr.mxu0 0.0
    %378 = vmatpush1.msra.mxu0 0.0
    %379 = vmatprep.subr.mxu0 0.0
    %380 = vmatpush1.msra.mxu0 0.0
    %381 = vmatprep.subr.mxu0 0.0
    %382 = vmatpush1.msra.mxu0 0.0
    %383 = vmatprep.subr.mxu0 0.0
    %384 = vmatpush1.msra.mxu0 0.0
    %385 = vmatprep.subr.mxu0 0.0
    %386 = vmatpush1.msra.mxu0 0.0
    %387 = vmatprep.subr.mxu0 0.0
    %388 = vmatpush1.msra.mxu0 0.0
    %389 = vmatprep.subr.mxu0 0.0
    %390 = vmatpush1.msra.mxu0 0.0
    %391 = vmatprep.subr.mxu0 0.0
    %392 = vmatpush1.msra.mxu0 0.0
    %393 = vmatprep.subr.mxu0 0.0
    %394 = vmatpush1.msra.mxu0 0.0
    %395 = vmatprep.mubr.f32.mxu0 0.0
    %396 = vmatmul.mubr.f32.gmra.mrb[0].mxu0 %v307
    %v397 = vpop.f32.mrb[0].mxu0
    %v398 = vadd.f32 %v330, %v397
    %v399 = vpop.f32.mrb[0].mxu0
    %400 = vmatprep.mubr.f32.mxu0 0.0
    %401 = vmatmul.mubr.f32.gmra.mrb[0].mxu0 %v308
    %v402 = vpop.f32.mrb[0].mxu0
    %v403 = vadd.f32 %v330, %v402
    %v404 = vpop.f32.mrb[0].mxu0
    %405 = vdwg.mxu0
    %v406 = vtanh.pop %v398
    %v407 = vtanh.pop %v403
    %v408 = vld [vmem:[#allocation7 + $0x6] sm:$0x1]
    %v409 = vld [vmem:[#allocation7 + $0xa] sm:$0x1]
    %410 = vadd.xlane.f32.xlu0 %v406
    %v411 = vpop.xlane.xlu0 %410
    %412 = vadd.xlane.f32.xlu0 %v407
    %v413 = vpop.xlane.xlu0 %412
    %v414 = vmul.f32 %v406, %v406
    %v415 = vmul.f32 %v407, %v407
    %416 = vadd.xlane.f32.xlu0 %v414
    %v417 = vpop.xlane.xlu0 %416
    %418 = vadd.xlane.f32.xlu0 %v415
    %v419 = vpop.xlane.xlu0 %418
    %v420 = vmul.f32 %v411, 0.0078125
    %v421 = vmul.f32 %v413, 0.0078125
    %v422 = vmul.f32 %v417, 0.0078125
    %v423 = vmul.f32 %v419, 0.0078125
    %v424 = vmul.f32 %v420, %v420
    %v425 = vmul.f32 %v421, %v421
    %v426 = vsub.f32 %v422, %v424
    %v427 = vsub.f32 %v423, %v425
    %v428 = vmax.f32 %v426, 0.0
    %v429 = vmax.f32 %v427, 0.0
    %v430 = vsub.f32 %v406, %v420
    %v431 = vsub.f32 %v407, %v421
    %v432 = vadd.f32 %v428, 1e-05
    %v433 = vadd.f32 %v429, 1e-05
    %v434 = vrsqrt.pop %v432
    %v435 = vrsqrt.pop %v433
    %v436 = vmul.f32 %v430, %v434
    %v437 = vmul.f32 %v431, %v435
    %v438 = vlaneseq
    %v439 = vshrl.u32 %v438, 7
    %v440 = vsub.s32 0, %v439
    %v441 = vrot.slane %v408, %v440
    %v442 = vmul.f32 %v436, %v441
    %v443 = vmul.f32 %v437, %v441
    %v444 = vlaneseq
    %v445 = vshrl.u32 %v444, 7
    %v446 = vsub.s32 0, %v445
    %v447 = vrot.slane %v409, %v446
    %v448 = vadd.f32 %v442, %v447
    %v449 = vadd.f32 %v443, %v447
    %v450 = vadd.f32 %v161, %v448
    %v451 = vadd.f32 %v166, %v449
    %v452 = vtanh.pop %v450
    %v453 = vtanh.pop %v451
    %v454 = vld [vmem:[#allocation7 + $0xd] sm:$0x1]
    %v455 = vld [vmem:[#allocation7 + $0xf] sm:$0x1]
    %456 = vadd.xlane.f32.xlu0 %v452
    %v457 = vpop.xlane.xlu0 %456
    %458 = vadd.xlane.f32.xlu0 %v453
    %v459 = vpop.xlane.xlu0 %458
    %v460 = vmul.f32 %v452, %v452
    %v461 = vmul.f32 %v453, %v453
    %462 = vadd.xlane.f32.xlu0 %v460
    %v463 = vpop.xlane.xlu0 %462
    %464 = vadd.xlane.f32.xlu0 %v461
    %v465 = vpop.xlane.xlu0 %464
    %v466 = vmul.f32 %v457, 0.0078125
    %v467 = vmul.f32 %v459, 0.0078125
    %v468 = vmul.f32 %v463, 0.0078125
    %v469 = vmul.f32 %v465, 0.0078125
    %v470 = vmul.f32 %v466, %v466
    %v471 = vmul.f32 %v467, %v467
    %v472 = vsub.f32 %v468, %v470
    %v473 = vsub.f32 %v469, %v471
    %v474 = vmax.f32 %v472, 0.0
    %v475 = vmax.f32 %v473, 0.0
    %v476 = vsub.f32 %v452, %v466
    %v477 = vsub.f32 %v453, %v467
    %v478 = vadd.f32 %v474, 1e-05
    %v479 = vadd.f32 %v475, 1e-05
    %v480 = vrsqrt.pop %v478
    %v481 = vrsqrt.pop %v479
    %v482 = vmul.f32 %v476, %v480
    %v483 = vmul.f32 %v477, %v481
    %v484 = vlaneseq
    %v485 = vshrl.u32 %v484, 7
    %v486 = vsub.s32 0, %v485
    %v487 = vrot.slane %v454, %v486
    %v488 = vmul.f32 %v482, %v487
    %v489 = vmul.f32 %v483, %v487
    %v490 = vlaneseq
    %v491 = vshrl.u32 %v490, 7
    %v492 = vsub.s32 0, %v491
    %v493 = vrot.slane %v455, %v492
    %v494 = vadd.f32 %v488, %v493
    %v495 = vadd.f32 %v489, %v493
    %s496 = scalar_lea.vmem [#allocation6], 256
    %v497 = vld [vmem:[%s496] sm:$0xff]
    %v498 = vld [vmem:[%s496 + $0x8] sm:$0xff]
    %v499 = vld [vmem:[%s496 + $0x10] sm:$0xff]
    %v500 = vld [vmem:[%s496 + $0x18] sm:$0xff]
    %v501 = vld [vmem:[%s496 + $0x20] sm:$0xff]
    %v502 = vld [vmem:[%s496 + $0x28] sm:$0xff]
    %v503 = vld [vmem:[%s496 + $0x30] sm:$0xff]
    %v504 = vld [vmem:[%s496 + $0x38] sm:$0xff]
    %v505 = vld [vmem:[%s496 + $0x40] sm:$0xff]
    %v506 = vld [vmem:[%s496 + $0x48] sm:$0xff]
    %v507 = vld [vmem:[%s496 + $0x50] sm:$0xff]
    %v508 = vld [vmem:[%s496 + $0x58] sm:$0xff]
    %v509 = vld [vmem:[%s496 + $0x60] sm:$0xff]
    %v510 = vld [vmem:[%s496 + $0x68] sm:$0xff]
    %v511 = vld [vmem:[%s496 + $0x70] sm:$0xff]
    %v512 = vld [vmem:[%s496 + $0x78] sm:$0xff]
    %v513 = vld [vmem:[#allocation7 + $0x3] sm:$0x1]
    %v514 = vlaneseq
    %v515 = vshrl.u32 %v514, 7
    %v516 = vsub.s32 0, %v515
    %v517 = vrot.slane %v513, %v516
    %518 = vmatprep.subr.mxu0 0.0
    %519 = vmatpush1.msra.mxu0 %v497
    %520 = vmatprep.subr.mxu0 0.0
    %521 = vmatpush1.msra.mxu0 %v498
    %522 = vmatprep.subr.mxu0 0.0
    %523 = vmatpush1.msra.mxu0 %v499
    %524 = vmatprep.subr.mxu0 0.0
    %525 = vmatpush1.msra.mxu0 %v500
    %526 = vmatprep.subr.mxu0 0.0
    %527 = vmatpush1.msra.mxu0 %v501
    %528 = vmatprep.subr.mxu0 0.0
    %529 = vmatpush1.msra.mxu0 %v502
    %530 = vmatprep.subr.mxu0 0.0
    %531 = vmatpush1.msra.mxu0 %v503
    %532 = vmatprep.subr.mxu0 0.0
    %533 = vmatpush1.msra.mxu0 %v504
    %534 = vmatprep.subr.mxu0 0.0
    %535 = vmatpush1.msra.mxu0 %v505
    %536 = vmatprep.subr.mxu0 0.0
    %537 = vmatpush1.msra.mxu0 %v506
    %538 = vmatprep.subr.mxu0 0.0
    %539 = vmatpush1.msra.mxu0 %v507
    %540 = vmatprep.subr.mxu0 0.0
    %541 = vmatpush1.msra.mxu0 %v508
    %542 = vmatprep.subr.mxu0 0.0
    %543 = vmatpush1.msra.mxu0 %v509
    %544 = vmatprep.subr.mxu0 0.0
    %545 = vmatpush1.msra.mxu0 %v510
    %546 = vmatprep.subr.mxu0 0.0
    %547 = vmatpush1.msra.mxu0 %v511
    %548 = vmatprep.subr.mxu0 0.0
    %549 = vmatpush1.msra.mxu0 %v512
    %550 = vmatprep.subr.mxu0 0.0
    %551 = vmatpush1.msra.mxu0 0.0
    %552 = vmatprep.subr.mxu0 0.0
    %553 = vmatpush1.msra.mxu0 0.0
    %554 = vmatprep.subr.mxu0 0.0
    %555 = vmatpush1.msra.mxu0 0.0
    %556 = vmatprep.subr.mxu0 0.0
    %557 = vmatpush1.msra.mxu0 0.0
    %558 = vmatprep.subr.mxu0 0.0
    %559 = vmatpush1.msra.mxu0 0.0
    %560 = vmatprep.subr.mxu0 0.0
    %561 = vmatpush1.msra.mxu0 0.0
    %562 = vmatprep.subr.mxu0 0.0
    %563 = vmatpush1.msra.mxu0 0.0
    %564 = vmatprep.subr.mxu0 0.0
    %565 = vmatpush1.msra.mxu0 0.0
    %566 = vmatprep.subr.mxu0 0.0
    %567 = vmatpush1.msra.mxu0 0.0
    %568 = vmatprep.subr.mxu0 0.0
    %569 = vmatpush1.msra.mxu0 0.0
    %570 = vmatprep.subr.mxu0 0.0
    %571 = vmatpush1.msra.mxu0 0.0
    %572 = vmatprep.subr.mxu0 0.0
    %573 = vmatpush1.msra.mxu0 0.0
    %574 = vmatprep.subr.mxu0 0.0
    %575 = vmatpush1.msra.mxu0 0.0
    %576 = vmatprep.subr.mxu0 0.0
    %577 = vmatpush1.msra.mxu0 0.0
    %578 = vmatprep.subr.mxu0 0.0
    %579 = vmatpush1.msra.mxu0 0.0
    %580 = vmatprep.subr.mxu0 0.0
    %581 = vmatpush1.msra.mxu0 0.0
    %582 = vmatprep.mubr.f32.mxu0 0.0
    %583 = vmatmul.mubr.f32.gmra.mrb[0].mxu0 %v494
    %v584 = vpop.f32.mrb[0].mxu0
    %v585 = vadd.f32 %v517, %v584
    %v586 = vpop.f32.mrb[0].mxu0
    %587 = vmatprep.mubr.f32.mxu0 0.0
    %588 = vmatmul.mubr.f32.gmra.mrb[0].mxu0 %v495
    %v589 = vpop.f32.mrb[0].mxu0
    %v590 = vadd.f32 %v517, %v589
    %v591 = vpop.f32.mrb[0].mxu0
    %592 = vdwg.mxu0
    %v593 = vtanh.pop %v585
    %v594 = vtanh.pop %v590
    %v595 = vld [vmem:[#allocation7 + $0x7] sm:$0x1]
    %v596 = vld [vmem:[#allocation7 + $0xb] sm:$0x1]
    %597 = vadd.xlane.f32.xlu0 %v593
    %v598 = vpop.xlane.xlu0 %597
    %599 = vadd.xlane.f32.xlu0 %v594
    %v600 = vpop.xlane.xlu0 %599
    %v601 = vmul.f32 %v593, %v593
    %v602 = vmul.f32 %v594, %v594
    %603 = vadd.xlane.f32.xlu0 %v601
    %v604 = vpop.xlane.xlu0 %603
    %605 = vadd.xlane.f32.xlu0 %v602
    %v606 = vpop.xlane.xlu0 %605
    %v607 = vmul.f32 %v598, 0.0078125
    %v608 = vmul.f32 %v600, 0.0078125
    %v609 = vmul.f32 %v604, 0.0078125
    %v610 = vmul.f32 %v606, 0.0078125
    %v611 = vmul.f32 %v607, %v607
    %v612 = vmul.f32 %v608, %v608
    %v613 = vsub.f32 %v609, %v611
    %v614 = vsub.f32 %v610, %v612
    %v615 = vmax.f32 %v613, 0.0
    %v616 = vmax.f32 %v614, 0.0
    %v617 = vsub.f32 %v593, %v607
    %v618 = vsub.f32 %v594, %v608
    %v619 = vadd.f32 %v615, 1e-05
    %v620 = vadd.f32 %v616, 1e-05
    %v621 = vrsqrt.pop %v619
    %v622 = vrsqrt.pop %v620
    %v623 = vmul.f32 %v617, %v621
    %v624 = vmul.f32 %v618, %v622
    %v625 = vlaneseq
    %v626 = vshrl.u32 %v625, 7
    %v627 = vsub.s32 0, %v626
    %v628 = vrot.slane %v595, %v627
    %v629 = vmul.f32 %v623, %v628
    %v630 = vmul.f32 %v624, %v628
    %v631 = vlaneseq
    %v632 = vshrl.u32 %v631, 7
    %v633 = vsub.s32 0, %v632
    %v634 = vrot.slane %v596, %v633
    %v635 = vadd.f32 %v629, %v634
    %v636 = vadd.f32 %v630, %v634
    %s637 = scalar_lea.vmem [#allocation6], 384
    %v638 = vld [vmem:[%s637] sm:$0xff]
    %v639 = vld [vmem:[%s637 + $0x8] sm:$0xff]
    %v640 = vld [vmem:[%s637 + $0x10] sm:$0xff]
    %v641 = vld [vmem:[%s637 + $0x18] sm:$0xff]
    %v642 = vld [vmem:[%s637 + $0x20] sm:$0xff]
    %v643 = vld [vmem:[%s637 + $0x28] sm:$0xff]
    %v644 = vld [vmem:[%s637 + $0x30] sm:$0xff]
    %v645 = vld [vmem:[%s637 + $0x38] sm:$0xff]
    %v646 = vld [vmem:[%s637 + $0x40] sm:$0xff]
    %v647 = vld [vmem:[%s637 + $0x48] sm:$0xff]
    %v648 = vld [vmem:[%s637 + $0x50] sm:$0xff]
    %v649 = vld [vmem:[%s637 + $0x58] sm:$0xff]
    %v650 = vld [vmem:[%s637 + $0x60] sm:$0xff]
    %v651 = vld [vmem:[%s637 + $0x68] sm:$0xff]
    %v652 = vld [vmem:[%s637 + $0x70] sm:$0xff]
    %v653 = vld [vmem:[%s637 + $0x78] sm:$0xff]
    %v654 = vld [vmem:[#allocation7 + $0x4] sm:$0x1]
    %v655 = vlaneseq
    %v656 = vshrl.u32 %v655, 7
    %v657 = vsub.s32 0, %v656
    %v658 = vrot.slane %v654, %v657
    %659 = vmatprep.subr.mxu0 0.0
    %660 = vmatpush1.msra.mxu0 %v638
    %661 = vmatprep.subr.mxu0 0.0
    %662 = vmatpush1.msra.mxu0 %v639
    %663 = vmatprep.subr.mxu0 0.0
    %664 = vmatpush1.msra.mxu0 %v640
    %665 = vmatprep.subr.mxu0 0.0
    %666 = vmatpush1.msra.mxu0 %v641
    %667 = vmatprep.subr.mxu0 0.0
    %668 = vmatpush1.msra.mxu0 %v642
    %669 = vmatprep.subr.mxu0 0.0
    %670 = vmatpush1.msra.mxu0 %v643
    %671 = vmatprep.subr.mxu0 0.0
    %672 = vmatpush1.msra.mxu0 %v644
    %673 = vmatprep.subr.mxu0 0.0
    %674 = vmatpush1.msra.mxu0 %v645
    %675 = vmatprep.subr.mxu0 0.0
    %676 = vmatpush1.msra.mxu0 %v646
    %677 = vmatprep.subr.mxu0 0.0
    %678 = vmatpush1.msra.mxu0 %v647
    %679 = vmatprep.subr.mxu0 0.0
    %680 = vmatpush1.msra.mxu0 %v648
    %681 = vmatprep.subr.mxu0 0.0
    %682 = vmatpush1.msra.mxu0 %v649
    %683 = vmatprep.subr.mxu0 0.0
    %684 = vmatpush1.msra.mxu0 %v650
    %685 = vmatprep.subr.mxu0 0.0
    %686 = vmatpush1.msra.mxu0 %v651
    %687 = vmatprep.subr.mxu0 0.0
    %688 = vmatpush1.msra.mxu0 %v652
    %689 = vmatprep.subr.mxu0 0.0
    %690 = vmatpush1.msra.mxu0 %v653
    %691 = vmatprep.subr.mxu0 0.0
    %692 = vmatpush1.msra.mxu0 0.0
    %693 = vmatprep.subr.mxu0 0.0
    %694 = vmatpush1.msra.mxu0 0.0
    %695 = vmatprep.subr.mxu0 0.0
    %696 = vmatpush1.msra.mxu0 0.0
    %697 = vmatprep.subr.mxu0 0.0
    %698 = vmatpush1.msra.mxu0 0.0
    %699 = vmatprep.subr.mxu0 0.0
    %700 = vmatpush1.msra.mxu0 0.0
    %701 = vmatprep.subr.mxu0 0.0
    %702 = vmatpush1.msra.mxu0 0.0
    %703 = vmatprep.subr.mxu0 0.0
    %704 = vmatpush1.msra.mxu0 0.0
    %705 = vmatprep.subr.mxu0 0.0
    %706 = vmatpush1.msra.mxu0 0.0
    %707 = vmatprep.subr.mxu0 0.0
    %708 = vmatpush1.msra.mxu0 0.0
    %709 = vmatprep.subr.mxu0 0.0
    %710 = vmatpush1.msra.mxu0 0.0
    %711 = vmatprep.subr.mxu0 0.0
    %712 = vmatpush1.msra.mxu0 0.0
    %713 = vmatprep.subr.mxu0 0.0
    %714 = vmatpush1.msra.mxu0 0.0
    %715 = vmatprep.subr.mxu0 0.0
    %716 = vmatpush1.msra.mxu0 0.0
    %717 = vmatprep.subr.mxu0 0.0
    %718 = vmatpush1.msra.mxu0 0.0
    %719 = vmatprep.subr.mxu0 0.0
    %720 = vmatpush1.msra.mxu0 0.0
    %721 = vmatprep.subr.mxu0 0.0
    %722 = vmatpush1.msra.mxu0 0.0
    %723 = vmatprep.mubr.f32.mxu0 0.0
    %724 = vmatmul.mubr.f32.gmra.mrb[0].mxu0 %v635
    %v725 = vpop.f32.mrb[0].mxu0
    %v726 = vadd.f32 %v658, %v725
    %v727 = vpop.f32.mrb[0].mxu0
    %728 = vmatprep.mubr.f32.mxu0 0.0
    %729 = vmatmul.mubr.f32.gmra.mrb[0].mxu0 %v636
    %v730 = vpop.f32.mrb[0].mxu0
    %v731 = vadd.f32 %v658, %v730
    %v732 = vpop.f32.mrb[0].mxu0
    %733 = vdwg.mxu0
    %v734 = vtanh.pop %v726
    %v735 = vtanh.pop %v731
    %v736 = vld [vmem:[#allocation7 + $0x8] sm:$0x1]
    %v737 = vld [vmem:[#allocation7 + $0xc] sm:$0x1]
    %738 = vadd.xlane.f32.xlu0 %v734
    %v739 = vpop.xlane.xlu0 %738
    %740 = vadd.xlane.f32.xlu0 %v735
    %v741 = vpop.xlane.xlu0 %740
    %v742 = vmul.f32 %v734, %v734
    %v743 = vmul.f32 %v735, %v735
    %744 = vadd.xlane.f32.xlu0 %v742
    %v745 = vpop.xlane.xlu0 %744
    %746 = vadd.xlane.f32.xlu0 %v743
    %v747 = vpop.xlane.xlu0 %746
    %v748 = vmul.f32 %v739, 0.0078125
    %v749 = vmul.f32 %v741, 0.0078125
    %v750 = vmul.f32 %v745, 0.0078125
    %v751 = vmul.f32 %v747, 0.0078125
    %v752 = vmul.f32 %v748, %v748
    %v753 = vmul.f32 %v749, %v749
    %v754 = vsub.f32 %v750, %v752
    %v755 = vsub.f32 %v751, %v753
    %v756 = vmax.f32 %v754, 0.0
    %v757 = vmax.f32 %v755, 0.0
    %v758 = vsub.f32 %v734, %v748
    %v759 = vsub.f32 %v735, %v749
    %v760 = vadd.f32 %v756, 1e-05
    %v761 = vadd.f32 %v757, 1e-05
    %v762 = vrsqrt.pop %v760
    %v763 = vrsqrt.pop %v761
    %v764 = vmul.f32 %v758, %v762
    %v765 = vmul.f32 %v759, %v763
    %v766 = vlaneseq
    %v767 = vshrl.u32 %v766, 7
    %v768 = vsub.s32 0, %v767
    %v769 = vrot.slane %v736, %v768
    %v770 = vmul.f32 %v764, %v769
    %v771 = vmul.f32 %v765, %v769
    %v772 = vlaneseq
    %v773 = vshrl.u32 %v772, 7
    %v774 = vsub.s32 0, %v773
    %v775 = vrot.slane %v737, %v774
    %v776 = vadd.f32 %v770, %v775
    %v777 = vadd.f32 %v771, %v775
    %v778 = vadd.f32 %v494, %v776
    %v779 = vadd.f32 %v495, %v777
    %v780 = vtanh.pop %v778
    %v781 = vtanh.pop %v779
    %v782 = vld [vmem:[#allocation7 + $0xe] sm:$0x1]
    %v783 = vld [vmem:[#allocation7 + $0x10] sm:$0x1]
    %784 = vadd.xlane.f32.xlu0 %v780
    %v785 = vpop.xlane.xlu0 %784
    %786 = vadd.xlane.f32.xlu0 %v781
    %v787 = vpop.xlane.xlu0 %786
    %v788 = vmul.f32 %v780, %v780
    %v789 = vmul.f32 %v781, %v781
    %790 = vadd.xlane.f32.xlu0 %v788
    %v791 = vpop.xlane.xlu0 %790
    %792 = vadd.xlane.f32.xlu0 %v789
    %v793 = vpop.xlane.xlu0 %792
    %v794 = vmul.f32 %v785, 0.0078125
    %v795 = vmul.f32 %v787, 0.0078125
    %v796 = vmul.f32 %v791, 0.0078125
    %v797 = vmul.f32 %v793, 0.0078125
    %v798 = vmul.f32 %v794, %v794
    %v799 = vmul.f32 %v795, %v795
    %v800 = vsub.f32 %v796, %v798
    %v801 = vsub.f32 %v797, %v799
    %v802 = vmax.f32 %v800, 0.0
    %v803 = vmax.f32 %v801, 0.0
    %v804 = vsub.f32 %v780, %v794
    %v805 = vsub.f32 %v781, %v795
    %v806 = vadd.f32 %v802, 1e-05
    %v807 = vadd.f32 %v803, 1e-05
    %v808 = vrsqrt.pop %v806
    %v809 = vrsqrt.pop %v807
    %v810 = vmul.f32 %v804, %v808
    %v811 = vmul.f32 %v805, %v809
    %v812 = vlaneseq
    %v813 = vshrl.u32 %v812, 7
    %v814 = vsub.s32 0, %v813
    %v815 = vrot.slane %v782, %v814
    %v816 = vmul.f32 %v810, %v815
    %v817 = vmul.f32 %v811, %v815
    %v818 = vlaneseq
    %v819 = vshrl.u32 %v818, 7
    %v820 = vsub.s32 0, %v819
    %v821 = vrot.slane %v783, %v820
    %v822 = vadd.f32 %v816, %v821
    %v823 = vadd.f32 %v817, %v821
    %v824 = vld [vmem:[#allocation7 + $0x11] sm:$0x1]
    %v825 = vld [vmem:[#allocation7 + $0x12] sm:$0x1]
    %v826 = vlaneseq
    %v827 = vshrl.u32 %v826, 7
    %v828 = vsub.s32 0, %v827
    %v829 = vrot.slane %v824, %v828
    %v830 = vmul.f32 %v822, %v829
    %v831 = vmul.f32 %v823, %v829
    %832 = vadd.xlane.f32.xlu0 %v830
    %v833 = vpop.xlane.xlu0 %832
    %834 = vadd.xlane.f32.xlu0 %v831
    %v835 = vpop.xlane.xlu0 %834
    %v836 = vlaneseq
    %v837 = vshrl.u32 %v836, 7
    %v838 = vsub.s32 0, %v837
    %v839 = vrot.slane %v825, %v838
    %v840 = vadd.f32 %v833, %v839
    %v841 = vadd.f32 %v835, %v839
    %v842 = vxor.u32 %v840, 2147483648
    %v843 = vxor.u32 %v841, 2147483648
    %v844 = vmul.f32 %v842, 1.442695
    %v845 = vpow.pop %v844
    %v846 = vmul.f32 %v843, 1.442695
    %v847 = vpow.pop %v846
    %v848 = vadd.f32 %v845, 1.0
    %v849 = vadd.f32 %v847, 1.0
    %v850 = vrcp.pop %v848
    %v851 = vmul.f32 1.0, %v850
    %v852 = vrcp.pop %v849
    %v853 = vmul.f32 1.0, %v852
    %855 = vset.pattern.permute.xlu0 0
    %856 = vperm.xlu0 %855, %v851
    %v857 = vpop.permute.xlu0 %856
    %860 = vset.pattern.permute.xlu0 0
    %861 = vperm.xlu0 %860, %v853
    %v862 = vpop.permute.xlu0 %861
    %864 = vst [vmem:[%s4] sm:$0xff] %v857
    %865 = vst [vmem:[%s4 + $0x8] sm:$0xff] %v862
    // Predicated region
    $region34: #{pure_res_dnn_classification.1} parent=1 // pred_check
      _
    $region35: #{pure_res_dnn_classification.1} parent=1 // pred_check_branch
      %867 = sbr.rel (0) target = $region37
    $region36: #{pure_res_dnn_classification.1} parent=1 // pred_region
      _
    $region37: #{pure_res_dnn_classification.1} parent=1 // pred_fallthru
      _
    // Predicated region
    $region38: #{pure_res_dnn_classification.1} parent=1 // pred_check
      _
    $region39: #{pure_res_dnn_classification.1} parent=1 // pred_check_branch
      %869 = sbr.rel (0) target = $region41
    $region40: #{pure_res_dnn_classification.1} parent=1 // pred_region
      _
    $region41: #{pure_res_dnn_classification.1} parent=1 // pred_fallthru
      _
    %870 = vsyncpa [#allocation3], 1
    %871 = vsyncpa [#allocation5], 1
    %872 = vsyncpa [#allocation8], 1

</llo_original>
